<compile_context>
chip_gen: v5e
topology: v5e:2x2
jax: 0.10.0
libtpu: 0.0.40
codegen_flags: <defaults>
</compile_context>

<pallas_src>
import jax
import jax.numpy as jnp
from jax.experimental import pallas as pl
from jax.experimental.pallas import tpu as pltpu


def _cdiv(a, b):
    return (a + b - 1) // b


def _round_up(x, m):
    return _cdiv(x, m) * m


def _sublane_multiple(*dtypes):
    """Native sublane packing: 8 rows for 4-byte, 16 for 2-byte, 32 for 1-byte."""
    m = 8
    for dt in dtypes:
        m = max(m, 32 // max(1, jnp.dtype(dt).itemsize))
    return m


# Lane-tile cap: bounds the in-kernel chunk fold to <= 64 unrolled 128-lane steps.
_TK_CAP = 8192


def _choose_tiles(bc, hw, elem_bytes, target_block_bytes, sublane):
    """Pick (tr, tk, n_row_tiles, n_col_tiles); tiles may overrun (masked in-kernel)."""
    # Lane tile: multiple of 128, capped, rebalanced to minimize overrun.
    tk = min(_round_up(hw, 128), _TK_CAP)
    n_col_tiles = _cdiv(hw, tk)
    tk = min(_round_up(_cdiv(hw, n_col_tiles), 128), tk)
    n_col_tiles = _cdiv(hw, tk)

    # Row tile: fill the VMEM budget, dtype-aware sublane multiple, rebalanced.
    tr_budget = max(sublane,
                    (target_block_bytes // (tk * elem_bytes)) // sublane * sublane)
    tr = min(tr_budget, _round_up(bc, sublane))
    n_row_tiles = _cdiv(bc, tr)
    tr = _round_up(_cdiv(bc, n_row_tiles), sublane)
    n_row_tiles = _cdiv(bc, tr)
    return tr, tk, n_row_tiles, n_col_tiles


def _make_iou_kernel(hw, tr, tk, n_col_tiles, cols_per_split, n_splits):
    """Kernel over grid (n_splits, row_tiles, cols_per_split); axis 2 is the reduction."""
    n_chunks = tk // 128
    covered = n_splits * cols_per_split * tk
    need_mask = covered != hw
    has_dup = (n_splits * cols_per_split) != n_col_tiles
    if need_mask:
        # Chunks before this index can never contain out-of-range columns.
        first_masked_chunk = 0 if has_dup else (hw - (n_col_tiles - 1) * tk) // 128
    else:
        first_masked_chunk = n_chunks  # no chunk ever masked

    def kernel(pred_ref, tgt_ref, inter_ref, union_ref):
        j = pl.program_id(2)

        @pl.when(j == 0)
        def _init():
            inter_ref[...] = jnp.zeros_like(inter_ref)
            union_ref[...] = jnp.zeros_like(union_ref)

        if need_mask:
            s = pl.program_id(0)
            # UNclamped global start column of this tile: out-of-range duplicate
            # tiles (from the split) get a start >= hw and are fully masked.
            col0 = (s * cols_per_split + j) * tk
            lane = jax.lax.broadcasted_iota(jnp.int32, (tr, 128), 1)

        acc_i = jnp.zeros((tr, 128), jnp.float32)
        acc_u = jnp.zeros((tr, 128), jnp.float32)
        for c in range(n_chunks):
            sl = slice(c * 128, (c + 1) * 128)
            x = pred_ref[:, sl].astype(jnp.float32)
            t = tgt_ref[:, sl].astype(jnp.float32)
            # sigmoid(x) == 0.5*tanh(0.5*x) + 0.5 : a single EUP transcendental.
            p = 0.5 * jnp.tanh(0.5 * x) + 0.5
            if need_mask and c >= first_masked_chunk:
                ok = (col0 + c * 128 + lane) < hw
                p = jnp.where(ok, p, 0.0)
                t = jnp.where(ok, t, 0.0)
            acc_i = acc_i + p * t
            acc_u = acc_u + (p + t)

        inter_ref[...] += acc_i
        union_ref[...] += acc_u

    return kernel


def iou_loss(pred, target, *,
             target_block_bytes=2 << 20,     # ~2 MiB per input block (plateau)
             vmem_limit_bytes=48 << 20):     # safe on v5e/v6e (128 MiB) and v7x (64 MiB)
    """Pallas implementation of IOU().forward(pred, target).

    pred, target: (B, C, H, W) arrays (NCHW). Returns a scalar float32.
    """
    assert pred.shape == target.shape
    B, C, H, W = pred.shape
    BC, HW = B * C, H * W

    elem_bytes = max(jnp.dtype(pred.dtype).itemsize,
                     jnp.dtype(target.dtype).itemsize)
    sublane = _sublane_multiple(pred.dtype, target.dtype)
    tr, tk, n_row_tiles, n_col_tiles = _choose_tiles(
        BC, HW, elem_bytes, target_block_bytes, sublane)

    # Split the HW reduction across a leading parallel axis (both v7x TCs get
    # work) only when the row axis provides no parallelism.
    n_splits = 2 if (n_row_tiles == 1 and n_col_tiles >= 2) else 1
    cols_per_split = _cdiv(n_col_tiles, n_splits)

    pred2 = pred.reshape(BC, HW)
    tgt2 = target.reshape(BC, HW)

    last_col_block = n_col_tiles - 1
    if n_splits * cols_per_split == n_col_tiles:
        def col_block(s, j):
            return s * cols_per_split + j
    else:
        # Clamp out-of-range duplicate tiles so the DMA stays in bounds; their
        # contribution is zeroed by the in-kernel column mask.
        def col_block(s, j):
            return jnp.minimum(s * cols_per_split + j, last_col_block)

    bc_pad = n_row_tiles * tr
    out_rows = n_splits * bc_pad

    kernel = _make_iou_kernel(HW, tr, tk, n_col_tiles, cols_per_split, n_splits)

    inter_p, union_p = pl.pallas_call(
        kernel,
        out_shape=(
            jax.ShapeDtypeStruct((out_rows, 128), jnp.float32),
            jax.ShapeDtypeStruct((out_rows, 128), jnp.float32),
        ),
        grid_spec=pl.GridSpec(
            grid=(n_splits, n_row_tiles, cols_per_split),
            in_specs=[
                pl.BlockSpec((tr, tk), lambda s, i, j: (i, col_block(s, j))),
                pl.BlockSpec((tr, tk), lambda s, i, j: (i, col_block(s, j))),
            ],
            out_specs=(
                pl.BlockSpec((tr, 128), lambda s, i, j: (s * n_row_tiles + i, 0)),
                pl.BlockSpec((tr, 128), lambda s, i, j: (s * n_row_tiles + i, 0)),
            ),
        ),
        compiler_params=pltpu.CompilerParams(
            dimension_semantics=("parallel", "parallel", "arbitrary"),
            vmem_limit_bytes=vmem_limit_bytes,
        ),
    )(pred2, tgt2)

    # Tiny epilogue: drop overrun rows, combine split halves and lane partials.
    inter_p = inter_p.reshape(n_splits, bc_pad, 128)[:, :BC, :]
    union_p = union_p.reshape(n_splits, bc_pad, 128)[:, :BC, :]
    inter = inter_p.sum(axis=(0, 2))
    union = union_p.sum(axis=(0, 2)) - inter
    return jnp.mean(1.0 - inter / union)


def iou_loss_ref(pred, target):
    """Pure-JAX reference matching the PyTorch module."""
    p = jax.nn.sigmoid(pred)
    inter = jnp.sum(p * target, axis=(2, 3))
    union = jnp.sum(p + target, axis=(2, 3)) - inter
    return jnp.mean(1.0 - inter / union)


if __name__ == "__main__":
    key = jax.random.PRNGKey(0)
    k1, k2, k3, k4, k5, k6 = jax.random.split(key, 6)

    # Primary small test, consistent with the module's NCHW inputs.
    B, C, H, W = 2, 4, 16, 16
    pred = jax.random.normal(k1, (B, C, H, W), dtype=jnp.float32)
    target = (jax.random.uniform(k2, (B, C, H, W), dtype=jnp.float32) > 0.5).astype(
        jnp.float32
    )
    out = jax.block_until_ready(iou_loss(pred, target))
    ref = iou_loss_ref(pred, target)
    assert jnp.allclose(out, ref, rtol=1e-5, atol=1e-5), (out, ref)

    # Ragged shape: exercises the in-kernel column-tail mask + row overrun
    # (B*C=6 rows in an 8-row tile, H*W=400 in a 512-lane tile), no padding copies.
    B2, C2, H2, W2 = 2, 3, 20, 20
    pred2 = jax.random.normal(k3, (B2, C2, H2, W2), dtype=jnp.float32)
    target2 = (jax.random.uniform(k4, (B2, C2, H2, W2)) > 0.5).astype(jnp.float32)
    out2 = jax.block_until_ready(iou_loss(pred2, target2))
    ref2 = iou_loss_ref(pred2, target2)
    assert jnp.allclose(out2, ref2, rtol=1e-5, atol=1e-5), (out2, ref2)

    # Small-BC / multi-tile-HW shape: exercises the split reduction axis
    # (n_splits=2) including the clamped+masked duplicate tile path.
    B3, C3, H3, W3 = 1, 2, 144, 144
    pred3 = jax.random.normal(k5, (B3, C3, H3, W3), dtype=jnp.float32)
    target3 = (jax.random.uniform(k6, (B3, C3, H3, W3)) > 0.5).astype(jnp.float32)
    out3 = jax.block_until_ready(iou_loss(pred3, target3))
    ref3 = iou_loss_ref(pred3, target3)
    assert jnp.allclose(out3, ref3, rtol=1e-5, atol=1e-5), (out3, ref3)

    print("KERNEL_OK")
</pallas_src>

<mosaic_0001>
module attributes {stable_mosaic.version = 11 : i64} {
  func.func @kernel(%arg0: i32, %arg1: i32, %arg2: i32, %arg3: memref<8x256xf32, #tpu.memory_space<vmem>>, %arg4: memref<8x256xf32, #tpu.memory_space<vmem>>, %arg5: memref<8x128xf32, #tpu.memory_space<vmem>>, %arg6: memref<8x128xf32, #tpu.memory_space<vmem>>) attributes {dimension_semantics = [#tpu.dimension_semantics<parallel>, #tpu.dimension_semantics<parallel>, #tpu.dimension_semantics<arbitrary>], iteration_bounds = array<i64: 1, 1, 1>, scalar_prefetch = 0 : i64, scratch_operands = 0 : i64, tpu.core_type = #tpu.core_type<tc>, window_params = [{transform_indices = @transform_0, window_bounds = array<i64: 8, 256>}, {transform_indices = @transform_1, window_bounds = array<i64: 8, 256>}, {transform_indices = @transform_2, window_bounds = array<i64: 8, 128>}, {transform_indices = @transform_3, window_bounds = array<i64: 8, 128>}]} {
    %c0_i32 = arith.constant 0 : i32
    %0 = arith.cmpi eq, %arg2, %c0_i32 : i32
    %1 = arith.extui %0 : i1 to i32
    %c0_i32_0 = arith.constant 0 : i32
    %2 = arith.cmpi ne, %1, %c0_i32_0 : i32
    scf.if %2 {
      %cst_22 = arith.constant 0.000000e+00 : f32
      %37 = vector.broadcast %cst_22 : f32 to vector<8x128xf32>
      %c0_23 = arith.constant 0 : index
      %c0_24 = arith.constant 0 : index
      %38 = vector.load %arg5[%c0_23, %c0_24] : memref<8x128xf32, #tpu.memory_space<vmem>>, vector<8x128xf32>
      tpu.vector_store %arg5[%c0_23, %c0_24], %37 {strides = array<i32>} : memref<8x128xf32, #tpu.memory_space<vmem>>, vector<8x128xf32>,
      %cst_25 = arith.constant 0.000000e+00 : f32
      %39 = vector.broadcast %cst_25 : f32 to vector<8x128xf32>
      %c0_26 = arith.constant 0 : index
      %c0_27 = arith.constant 0 : index
      %40 = vector.load %arg6[%c0_26, %c0_27] : memref<8x128xf32, #tpu.memory_space<vmem>>, vector<8x128xf32>
      tpu.vector_store %arg6[%c0_26, %c0_27], %39 {strides = array<i32>} : memref<8x128xf32, #tpu.memory_space<vmem>>, vector<8x128xf32>,
    } else {
    }
    %cst = arith.constant 0.000000e+00 : f32
    %3 = vector.broadcast %cst : f32 to vector<8x128xf32>
    %cst_1 = arith.constant 0.000000e+00 : f32
    %4 = vector.broadcast %cst_1 : f32 to vector<8x128xf32>
    %c0 = arith.constant 0 : index
    %c0_2 = arith.constant 0 : index
    %5 = vector.load %arg3[%c0, %c0_2] : memref<8x256xf32, #tpu.memory_space<vmem>>, vector<8x128xf32>
    %c0_3 = arith.constant 0 : index
    %c0_4 = arith.constant 0 : index
    %6 = vector.load %arg4[%c0_3, %c0_4] : memref<8x256xf32, #tpu.memory_space<vmem>>, vector<8x128xf32>
    %cst_5 = arith.constant 5.000000e-01 : f32
    %7 = vector.broadcast %cst_5 : f32 to vector<8x128xf32>
    %8 = arith.mulf %7, %5 : vector<8x128xf32>
    %9 = math.tanh %8 : vector<8x128xf32>
    %cst_6 = arith.constant 5.000000e-01 : f32
    %10 = vector.broadcast %cst_6 : f32 to vector<8x128xf32>
    %11 = arith.mulf %10, %9 : vector<8x128xf32>
    %cst_7 = arith.constant 5.000000e-01 : f32
    %12 = vector.broadcast %cst_7 : f32 to vector<8x128xf32>
    %13 = arith.addf %11, %12 : vector<8x128xf32>
    %14 = arith.mulf %13, %6 : vector<8x128xf32>
    %15 = arith.addf %3, %14 : vector<8x128xf32>
    %16 = arith.addf %13, %6 : vector<8x128xf32>
    %17 = arith.addf %4, %16 : vector<8x128xf32>
    %c0_8 = arith.constant 0 : index
    %c128 = arith.constant 128 : index
    %18 = vector.load %arg3[%c0_8, %c128] : memref<8x256xf32, #tpu.memory_space<vmem>>, vector<8x128xf32>
    %c0_9 = arith.constant 0 : index
    %c128_10 = arith.constant 128 : index
    %19 = vector.load %arg4[%c0_9, %c128_10] : memref<8x256xf32, #tpu.memory_space<vmem>>, vector<8x128xf32>
    %cst_11 = arith.constant 5.000000e-01 : f32
    %20 = vector.broadcast %cst_11 : f32 to vector<8x128xf32>
    %21 = arith.mulf %20, %18 : vector<8x128xf32>
    %22 = math.tanh %21 : vector<8x128xf32>
    %cst_12 = arith.constant 5.000000e-01 : f32
    %23 = vector.broadcast %cst_12 : f32 to vector<8x128xf32>
    %24 = arith.mulf %23, %22 : vector<8x128xf32>
    %cst_13 = arith.constant 5.000000e-01 : f32
    %25 = vector.broadcast %cst_13 : f32 to vector<8x128xf32>
    %26 = arith.addf %24, %25 : vector<8x128xf32>
    %27 = arith.mulf %26, %19 : vector<8x128xf32>
    %28 = arith.addf %15, %27 : vector<8x128xf32>
    %29 = arith.addf %26, %19 : vector<8x128xf32>
    %30 = arith.addf %17, %29 : vector<8x128xf32>
    %c0_14 = arith.constant 0 : index
    %c0_15 = arith.constant 0 : index
    %31 = vector.load %arg5[%c0_14, %c0_15] : memref<8x128xf32, #tpu.memory_space<vmem>>, vector<8x128xf32>
    %32 = arith.addf %31, %28 : vector<8x128xf32>
    %c0_16 = arith.constant 0 : index
    %c0_17 = arith.constant 0 : index
    %33 = vector.load %arg5[%c0_16, %c0_17] : memref<8x128xf32, #tpu.memory_space<vmem>>, vector<8x128xf32>
    tpu.vector_store %arg5[%c0_16, %c0_17], %32 {strides = array<i32>} : memref<8x128xf32, #tpu.memory_space<vmem>>, vector<8x128xf32>,
    %c0_18 = arith.constant 0 : index
    %c0_19 = arith.constant 0 : index
    %34 = vector.load %arg6[%c0_18, %c0_19] : memref<8x128xf32, #tpu.memory_space<vmem>>, vector<8x128xf32>
    %35 = arith.addf %34, %30 : vector<8x128xf32>
    %c0_20 = arith.constant 0 : index
    %c0_21 = arith.constant 0 : index
    %36 = vector.load %arg6[%c0_20, %c0_21] : memref<8x128xf32, #tpu.memory_space<vmem>>, vector<8x128xf32>
    tpu.vector_store %arg6[%c0_20, %c0_21], %35 {strides = array<i32>} : memref<8x128xf32, #tpu.memory_space<vmem>>, vector<8x128xf32>,
    return
  }
  func.func @transform_0(%arg0: i32, %arg1: i32, %arg2: i32) -> (i32, i32) {
    %c1_i32 = arith.constant 1 : i32
    %0 = arith.muli %arg0, %c1_i32 : i32
    %1 = arith.addi %0, %arg2 : i32
    %c0_i32 = arith.constant 0 : i32
    return %arg1, %1 : i32, i32
  }
  func.func @transform_1(%arg0: i32, %arg1: i32, %arg2: i32) -> (i32, i32) {
    %c1_i32 = arith.constant 1 : i32
    %0 = arith.muli %arg0, %c1_i32 : i32
    %1 = arith.addi %0, %arg2 : i32
    %c0_i32 = arith.constant 0 : i32
    return %arg1, %1 : i32, i32
  }
  func.func @transform_2(%arg0: i32, %arg1: i32, %arg2: i32) -> (i32, i32) {
    %c1_i32 = arith.constant 1 : i32
    %0 = arith.muli %arg0, %c1_i32 : i32
    %1 = arith.addi %0, %arg1 : i32
    %c0_i32 = arith.constant 0 : i32
    %c0_i32_0 = arith.constant 0 : i32
    return %1, %c0_i32 : i32, i32
  }
  func.func @transform_3(%arg0: i32, %arg1: i32, %arg2: i32) -> (i32, i32) {
    %c1_i32 = arith.constant 1 : i32
    %0 = arith.muli %arg0, %c1_i32 : i32
    %1 = arith.addi %0, %arg1 : i32
    %c0_i32 = arith.constant 0 : i32
    %c0_i32_0 = arith.constant 0 : i32
    return %1, %c0_i32 : i32, i32
  }
}

</mosaic_0001>

<llo_original>
// kernel: tpu_custom_call.1
$region0: #{tpu_custom_call.1}
  #allocation0 [shape = 'u32[]', space=smem, size = 0x4, offset = 0x4, fixed_abs, tag = 'smem constant byte address 0x4 - core index']
  #allocation1 [shape = 'u32[72,128]{1,0:T(1,128)}', space=vmem, size = 0x9000, scoped, tag = 'internal scratch']
  %s0 = inlined_call_operand.hbm [shape: f32[8,256], index: 0, kind: input, shape index: {}]
  %s1 = inlined_call_operand.hbm [shape: f32[8,256], index: 1, kind: input, shape index: {}]
  %s2 = inlined_call_operand.hbm [shape: f32[8,128], index: 2, kind: output, shape index: {0}]
  %s3 = inlined_call_operand.hbm [shape: f32[8,128], index: 3, kind: output, shape index: {1}]
  %4 = xla_tuple %s2, %s3
  %s5 = sld [smem:[#allocation0]]
  $region38: #{tpu_custom_call.1} parent=0
    _
  %s7 = ssub.s32 1, %s5
  %s8 = scalar_select 0, %s7, %s5
  $region1: #{tpu_custom_call.1} parent=0
    #allocation2 [shape = 'u8[8192]{0}', space=vmem, size = 0x2000, scoped, tag = 'input window, operand 0, single buffered']
    #allocation3 [shape = 's32[1]{0}', space=sflag, size = 0x4, scoped, tag = 'scoped memory for tpu_custom_call.1']
    #allocation4 [shape = 's32[1]{0}', space=sflag, size = 0x4, scoped, tag = 'scoped memory for tpu_custom_call.1']
    #allocation5 [shape = 'u8[8192]{0}', space=vmem, size = 0x2000, scoped, tag = 'input window, operand 1, single buffered']
    #allocation6 [shape = 's32[1]{0}', space=sflag, size = 0x4, scoped, tag = 'scoped memory for tpu_custom_call.1']
    #allocation7 [shape = 'u8[4096]{0}', space=vmem, size = 0x1000, scoped, tag = 'output window, operand 0, single buffered']
    #allocation8 [shape = 'u8[4096]{0}', space=vmem, size = 0x1000, scoped, tag = 'output window, operand 1, single buffered']
    #allocation9 [shape = 's32[1]{0}', space=sflag, size = 0x4, scoped, tag = 'scoped memory for tpu_custom_call.1']
    %9 = vsyncpa [#allocation3], 0
    %10 = vsyncpa [#allocation6], 0
    %11 = vsyncpa [#allocation4], 0
    %12 = vsyncpa [#allocation9], 0
    // Predicated region
    $region2: #{tpu_custom_call.1} parent=1 // pred_check
      _
    $region3: #{tpu_custom_call.1} parent=1 // pred_check_branch
      %14 = sbr.rel (0) target = $region5
    $region4: #{tpu_custom_call.1} parent=1 // pred_region
      %s15 = sadd.s32 0, 0
      %s16 = smul.u32 2, %s15
      %18 = vsyncadd [#allocation3], 0
      %s19 = smul.addr %s16, 8
      %s20 = scalar_lea.hbm %s0, %s19
      %s22 = sshll.u32 %s20, 4
      %s23 = int_to_ptr.hbm [resolvable:$true] %s22
      %s24 = sshll.u32 [#allocation2], 4
      %s25 = int_to_ptr.vmem [resolvable:$true] %s24
      %27 = dma.hbm_to_vmem [thread:$0]  %s23, 256, %s25, [#allocation3]
    $region5: #{tpu_custom_call.1} parent=1 // pred_fallthru
      _
    // Predicated region
    $region6: #{tpu_custom_call.1} parent=1 // pred_check
      _
    $region7: #{tpu_custom_call.1} parent=1 // pred_check_branch
      %29 = sbr.rel (0) target = $region9
    $region8: #{tpu_custom_call.1} parent=1 // pred_region
      %s30 = sadd.s32 0, 0
      %s31 = smul.u32 2, %s30
      %33 = vsyncadd [#allocation6], 0
      %s34 = smul.addr %s31, 8
      %s35 = scalar_lea.hbm %s1, %s34
      %s37 = sshll.u32 %s35, 4
      %s38 = int_to_ptr.hbm [resolvable:$true] %s37
      %s39 = sshll.u32 [#allocation5], 4
      %s40 = int_to_ptr.vmem [resolvable:$true] %s39
      %42 = dma.hbm_to_vmem [thread:$0]  %s38, 256, %s40, [#allocation6]
    $region9: #{tpu_custom_call.1} parent=1 // pred_fallthru
      _
    // Predicated region
    $region10: #{tpu_custom_call.1} parent=1 // pred_check
      _
    $region11: #{tpu_custom_call.1} parent=1 // pred_check_branch
      %44 = sbr.rel (0) target = $region13
    $region12: #{tpu_custom_call.1} parent=1 // pred_region
      %46 = dma.done [#allocation3], 256
    $region13: #{tpu_custom_call.1} parent=1 // pred_fallthru
      _
    // Predicated region
    $region14: #{tpu_custom_call.1} parent=1 // pred_check
      _
    $region15: #{tpu_custom_call.1} parent=1 // pred_check_branch
      %48 = sbr.rel (0) target = $region17
    $region16: #{tpu_custom_call.1} parent=1 // pred_region
      %50 = dma.done [#allocation6], 256
    $region17: #{tpu_custom_call.1} parent=1 // pred_fallthru
      _
    %s51 = sadd.s32 0, 0
    %s52 = smul.u32 2, %s51
    %s53 = sadd.s32 0, 0
    %s54 = smul.u32 2, %s53
    %s55 = sadd.s32 0, 0
    %s56 = sadd.s32 0, 0
    %p57 = scmp.eq.s32.totalorder 0, 0
    // Predicated region
    $region18: #{tpu_custom_call.1} parent=1 // pred_check
      %p58 = pneg %p57
    $region19: #{tpu_custom_call.1} parent=1 // pred_check_branch
      %60 = sbr.rel (%p58) target = $region21
    $region20: #{tpu_custom_call.1} parent=1 // pred_region
      %61 = vst [vmem:[#allocation7] sm:$0xff] 0.0
      %62 = vst [vmem:[#allocation8] sm:$0xff] 0.0
    $region21: #{tpu_custom_call.1} parent=1 // pred_fallthru
      _
    %v63 = vld [vmem:[#allocation2] sm:$0xff]
    %v64 = vld [vmem:[#allocation5] sm:$0xff]
    %v65 = vmul.f32 %v63, 0.5
    %v66 = vtanh.pop %v65
    %v67 = vmul.f32 %v66, 0.5
    %v68 = vadd.f32 %v67, 0.5
    %v69 = vmul.f32 %v68, %v64
    %v70 = vadd.f32 %v69, 0.0
    %v71 = vadd.f32 %v68, %v64
    %v72 = vadd.f32 %v71, 0.0
    %v73 = vld [vmem:[#allocation2 + $0x8] sm:$0xff]
    %v74 = vld [vmem:[#allocation5 + $0x8] sm:$0xff]
    %v75 = vmul.f32 %v73, 0.5
    %v76 = vtanh.pop %v75
    %v77 = vmul.f32 %v76, 0.5
    %v78 = vadd.f32 %v77, 0.5
    %v79 = vmul.f32 %v78, %v74
    %v80 = vadd.f32 %v70, %v79
    %v81 = vadd.f32 %v78, %v74
    %v82 = vadd.f32 %v72, %v81
    %v83 = vld [vmem:[#allocation7] sm:$0xff]
    %v84 = vadd.f32 %v83, %v80
    %85 = vst [vmem:[#allocation7] sm:$0xff] %v84
    %v86 = vld [vmem:[#allocation8] sm:$0xff]
    %v87 = vadd.f32 %v86, %v82
    %88 = vst [vmem:[#allocation8] sm:$0xff] %v87
    // Predicated region
    $region22: #{tpu_custom_call.1} parent=1 // pred_check
      _
    $region23: #{tpu_custom_call.1} parent=1 // pred_check_branch
      %90 = sbr.rel (0) target = $region25
    $region24: #{tpu_custom_call.1} parent=1 // pred_region
      %s91 = sadd.s32 0, 0
      %93 = vsyncadd [#allocation4], 0
      %s94 = smul.addr %s91, 8
      %s95 = scalar_lea.hbm %s2, %s94
      %s97 = sshll.u32 [#allocation7], 4
      %s98 = int_to_ptr.vmem [resolvable:$true] %s97
      %s99 = sshll.u32 %s95, 4
      %s100 = int_to_ptr.hbm [resolvable:$true] %s99
      %102 = dma.vmem_to_hbm [thread:$0]  %s98, 128, %s100, [#allocation4]
    $region25: #{tpu_custom_call.1} parent=1 // pred_fallthru
      _
    // Predicated region
    $region26: #{tpu_custom_call.1} parent=1 // pred_check
      _
    $region27: #{tpu_custom_call.1} parent=1 // pred_check_branch
      %104 = sbr.rel (0) target = $region29
    $region28: #{tpu_custom_call.1} parent=1 // pred_region
      %s105 = sadd.s32 0, 0
      %107 = vsyncadd [#allocation9], 0
      %s108 = smul.addr %s105, 8
      %s109 = scalar_lea.hbm %s3, %s108
      %s111 = sshll.u32 [#allocation8], 4
      %s112 = int_to_ptr.vmem [resolvable:$true] %s111
      %s113 = sshll.u32 %s109, 4
      %s114 = int_to_ptr.hbm [resolvable:$true] %s113
      %116 = dma.vmem_to_hbm [thread:$0]  %s112, 128, %s114, [#allocation9]
    $region29: #{tpu_custom_call.1} parent=1 // pred_fallthru
      _
    // Predicated region
    $region30: #{tpu_custom_call.1} parent=1 // pred_check
      _
    $region31: #{tpu_custom_call.1} parent=1 // pred_check_branch
      %118 = sbr.rel (0) target = $region33
    $region32: #{tpu_custom_call.1} parent=1 // pred_region
      %120 = dma.done [#allocation4], 128
    $region33: #{tpu_custom_call.1} parent=1 // pred_fallthru
      _
    // Predicated region
    $region34: #{tpu_custom_call.1} parent=1 // pred_check
      _
    $region35: #{tpu_custom_call.1} parent=1 // pred_check_branch
      %122 = sbr.rel (0) target = $region37
    $region36: #{tpu_custom_call.1} parent=1 // pred_region
      %124 = dma.done [#allocation9], 128
    $region37: #{tpu_custom_call.1} parent=1 // pred_fallthru
      _
    %125 = vsyncpa [#allocation3], 1
    %126 = vsyncpa [#allocation6], 1
    %127 = vsyncpa [#allocation4], 1
    %128 = vsyncpa [#allocation9], 1

</llo_original>
